<compile_context>
chip_gen: v7x
topology: tpu7x:2x2x1
jax: 0.10.0
libtpu: 0.0.40
codegen_flags: <defaults>
</compile_context>

<pallas_src>
import types

import jax
import jax.numpy as jnp
from jax.experimental import pallas as pl
from jax.experimental.pallas import tpu as pltpu


# ----------------------------------------------------------------------------
# SelectItem -- perf feedback applied: no pallas_call, no stacked copy.
# ----------------------------------------------------------------------------
def select_item(inputs, item_index):
    """`inputs[item_index]` on a tuple/list of arrays.

    Static index -> plain Python indexing (free, fused into the consumer).
    Traced index over same-shaped items -> lax.switch (still no HBM stack).
    """
    if isinstance(item_index, int):
        return inputs[item_index]
    branches = [lambda i=i: inputs[i] for i in range(len(inputs))]
    return jax.lax.switch(item_index, branches)


def _vmem_spec():
    return pl.BlockSpec(memory_space=pltpu.MemorySpace.VMEM)


# ----------------------------------------------------------------------------
# Pallas kernel 1: single-direction GRU, grid over time, h carried in VMEM.
# ----------------------------------------------------------------------------
def _gru_step_kernel(x_ref, wih_ref, whh_ref, bih_ref, bhh_ref, o_ref, h_ref):
    t = pl.program_id(0)

    @pl.when(t == 0)
    def _():
        h_ref[...] = jnp.zeros_like(h_ref)

    hh = h_ref.shape[-1]
    x_t = x_ref[0].astype(jnp.float32)                        # (B, D)
    h = h_ref[...]                                            # (B, Hh)
    gx = jnp.dot(x_t, wih_ref[...], preferred_element_type=jnp.float32) + bih_ref[...]
    gh = jnp.dot(h, whh_ref[...], preferred_element_type=jnp.float32) + bhh_ref[...]
    r = jax.nn.sigmoid(gx[:, :hh] + gh[:, :hh])
    zg = jax.nn.sigmoid(gx[:, hh:2 * hh] + gh[:, hh:2 * hh])
    n = jnp.tanh(gx[:, 2 * hh:] + r * gh[:, 2 * hh:])
    h_new = (1.0 - zg) * n + zg * h
    h_ref[...] = h_new
    o_ref[0] = h_new.astype(o_ref.dtype)


def gru_direction_pallas(x_tbe, w_ih, w_hh, b_ih, b_hh):
    """x_tbe: (S, B, D) time-major.  Returns (S, B, Hh)."""
    S, B, D = x_tbe.shape
    Hh = w_hh.shape[1]
    H3 = 3 * Hh
    return pl.pallas_call(
        _gru_step_kernel,
        out_shape=jax.ShapeDtypeStruct((S, B, Hh), x_tbe.dtype),
        grid_spec=pltpu.PrefetchScalarGridSpec(
            num_scalar_prefetch=0,
            grid=(S,),
            in_specs=[
                pl.BlockSpec((1, B, D), lambda t: (t, 0, 0)),   # x_t
                pl.BlockSpec((D, H3), lambda t: (0, 0)),        # W_ih^T (resident)
                pl.BlockSpec((Hh, H3), lambda t: (0, 0)),       # W_hh^T (resident)
                pl.BlockSpec((1, H3), lambda t: (0, 0)),        # b_ih
                pl.BlockSpec((1, H3), lambda t: (0, 0)),        # b_hh
            ],
            out_specs=pl.BlockSpec((1, B, Hh), lambda t: (t, 0, 0)),
            scratch_shapes=[pltpu.VMEM((B, Hh), jnp.float32)],
        ),
        compiler_params=pltpu.CompilerParams(
            dimension_semantics=("arbitrary",)),   # sequential carry
    )(x_tbe, w_ih.T, w_hh.T, b_ih.reshape(1, H3), b_hh.reshape(1, H3))


def gru_direction_ref(x_tbe, w_ih, w_hh, b_ih, b_hh):
    """Pure-JAX reference (lax.scan)."""
    Hh = w_hh.shape[1]
    B = x_tbe.shape[1]

    def step(h, x_t):
        gx = x_t @ w_ih.T + b_ih
        gh = h @ w_hh.T + b_hh
        r = jax.nn.sigmoid(gx[:, :Hh] + gh[:, :Hh])
        zg = jax.nn.sigmoid(gx[:, Hh:2 * Hh] + gh[:, Hh:2 * Hh])
        n = jnp.tanh(gx[:, 2 * Hh:] + r * gh[:, 2 * Hh:])
        h_new = (1.0 - zg) * n + zg * h
        return h_new, h_new

    h0 = jnp.zeros((B, Hh), jnp.float32)
    _, ys = jax.lax.scan(step, h0, x_tbe)
    return ys


def gru_bidirectional(x_bse, layers, gru_dir_fn):
    """Bidirectional multi-layer GRU.  Returns (output, h_n) like nn.GRU."""
    y = x_bse
    h_n = []
    for lp in layers:
        x_tbe = jnp.transpose(y, (1, 0, 2))                                   # (S, B, D)
        out_f = gru_dir_fn(x_tbe, lp["w_ih_f"], lp["w_hh_f"], lp["b_ih_f"], lp["b_hh_f"])
        out_b_rev = gru_dir_fn(x_tbe[::-1], lp["w_ih_b"], lp["w_hh_b"], lp["b_ih_b"], lp["b_hh_b"])
        h_n.append(out_f[-1])
        h_n.append(out_b_rev[-1])
        out_b = out_b_rev[::-1]
        y = jnp.transpose(jnp.concatenate([out_f, out_b], axis=-1), (1, 0, 2))  # (B, S, 2*Hh)
    return y, jnp.stack(h_n, axis=0)


# ----------------------------------------------------------------------------
# Pallas kernel 2: fused LayerNorm + dropout(eval) + gen_fc.
# The SelectItem(0) slice is fused into this consumer (no standalone copy).
# ----------------------------------------------------------------------------
def _ln_fc_kernel(x_ref, g_ref, b_ref, w_ref, bias_ref, o_ref):
    x = x_ref[...].astype(jnp.float32)                      # (T, H)
    mean = jnp.mean(x, axis=-1, keepdims=True)
    xc = x - mean
    var = jnp.mean(xc * xc, axis=-1, keepdims=True)
    y = xc * jax.lax.rsqrt(var + 1e-5) * g_ref[...] + b_ref[...]
    o_ref[...] = (jnp.dot(y, w_ref[...], preferred_element_type=jnp.float32)
                  + bias_ref[...]).astype(o_ref.dtype)


def layernorm_linear_pallas(x_bsh, gamma, beta, w, bias):
    B, S, H = x_bsh.shape
    Z = w.shape[1]
    out = pl.pallas_call(
        _ln_fc_kernel,
        out_shape=jax.ShapeDtypeStruct((B * S, Z), x_bsh.dtype),
        in_specs=[_vmem_spec() for _ in range(5)],
        out_specs=_vmem_spec(),
    )(x_bsh.reshape(B * S, H), gamma.reshape(1, H), beta.reshape(1, H),
      w, bias.reshape(1, Z))
    return out.reshape(B, S, Z)


def ln_linear_ref(x_bsh, gamma, beta, w, bias, eps=1e-5):
    mean = x_bsh.mean(-1, keepdims=True)
    var = ((x_bsh - mean) ** 2).mean(-1, keepdims=True)
    y = (x_bsh - mean) * jax.lax.rsqrt(var + eps) * gamma + beta
    return y @ w + bias


# ----------------------------------------------------------------------------
# Pallas kernel 3: fused masked max-pool over sequence + cls_fc.
# ----------------------------------------------------------------------------
def _maxpool_fc_kernel(x_ref, m_ref, w_ref, bias_ref, o_ref):
    x = x_ref[...].astype(jnp.float32)                       # (B, S, H)
    m = m_ref[...]                                           # (B, S, 1)
    xm = x * m + (1.0 - m) * (-1.0e6)
    pooled = jnp.max(xm, axis=1)                             # (B, H)
    o_ref[...] = (jnp.dot(pooled, w_ref[...], preferred_element_type=jnp.float32)
                  + bias_ref[...]).astype(o_ref.dtype)


def masked_maxpool_linear_pallas(x_bsh, masks_, w, bias):
    B, S, H = x_bsh.shape
    C = w.shape[1]
    return pl.pallas_call(
        _maxpool_fc_kernel,
        out_shape=jax.ShapeDtypeStruct((B, C), x_bsh.dtype),
        in_specs=[_vmem_spec() for _ in range(4)],
        out_specs=_vmem_spec(),
    )(x_bsh, masks_, w, bias.reshape(1, C))


def maxpool_fc_ref(x_bsh, masks_, w, bias):
    xm = x_bsh * masks_ + (1.0 - masks_) * (-1.0e6)
    return xm.max(axis=1) @ w + bias


# ----------------------------------------------------------------------------
# Remaining (non-kernel) pieces of the forward.
# ----------------------------------------------------------------------------
def gumbel_softmax_hard(logits, key, tau=1.0):
    u = jax.random.uniform(key, logits.shape, minval=1e-6, maxval=1.0 - 1e-6)
    g = -jnp.log(-jnp.log(u))
    y_soft = jax.nn.softmax((logits + g) / tau, axis=-1)
    idx = jnp.argmax(y_soft, axis=-1)
    y_hard = jax.nn.one_hot(idx, logits.shape[-1], dtype=logits.dtype)
    return y_hard + y_soft - jax.lax.stop_gradient(y_soft)   # forward == y_hard


def rnp_0908_forward(params, inputs, masks, key):
    masks_ = masks[..., None]
    emb = jnp.take(params["embedding"], inputs, axis=0) * masks_
    # generator = gen GRU -> SelectItem(0) -> LayerNorm -> Dropout(eval) -> gen_fc
    gen_tuple = gru_bidirectional(emb, params["gen"], gru_direction_pallas)
    gen_seq = select_item(gen_tuple, 0)
    gen_logits = layernorm_linear_pallas(gen_seq, params["ln_gamma"], params["ln_beta"],
                                         params["gen_fc_w"], params["gen_fc_b"])
    z = gumbel_softmax_hard(gen_logits, key)
    cls_emb = emb * z[:, :, 1:2]
    cls_tuple = gru_bidirectional(cls_emb, params["cls"], gru_direction_pallas)
    cls_seq = select_item(cls_tuple, 0)
    cls_logits = masked_maxpool_linear_pallas(cls_seq, masks_,
                                              params["cls_fc_w"], params["cls_fc_b"])
    return z, cls_logits


def init_params(key, args):
    Hh = args.hidden_dim // 2
    E = args.embedding_dim
    keys = iter(jax.random.split(key, 64))

    def w(shape, scale=0.1):
        return (scale * jax.random.normal(next(keys), shape)).astype(jnp.float32)

    def gru_params(num_layers, in_dim):
        layers = []
        for layer in range(num_layers):
            d = in_dim if layer == 0 else 2 * Hh
            layers.append(dict(
                w_ih_f=w((3 * Hh, d)), w_hh_f=w((3 * Hh, Hh)),
                b_ih_f=w((3 * Hh,)), b_hh_f=w((3 * Hh,)),
                w_ih_b=w((3 * Hh, d)), w_hh_b=w((3 * Hh, Hh)),
                b_ih_b=w((3 * Hh,)), b_hh_b=w((3 * Hh,)),
            ))
        return layers

    gen = gru_params(args.num_layers, E)
    cls = gen if args.fr == 1 else gru_params(args.num_layers, E)
    return dict(
        embedding=w((args.vocab_size, E), 0.5),
        gen=gen, cls=cls,
        ln_gamma=jnp.ones((args.hidden_dim,), jnp.float32),
        ln_beta=jnp.zeros((args.hidden_dim,), jnp.float32),
        gen_fc_w=w((args.hidden_dim, 2)), gen_fc_b=w((2,)),
        cls_fc_w=w((args.hidden_dim, args.num_class)), cls_fc_b=w((args.num_class,)),
    )


if __name__ == "__main__":
    args = types.SimpleNamespace(vocab_size=100, embedding_dim=32, hidden_dim=32,
                                 num_layers=1, num_class=2, dropout=0.1, fr=1,
                                 pretrained_embedding=None)
    key = jax.random.PRNGKey(0)
    kp, ki, kg = jax.random.split(key, 3)
    params = init_params(kp, args)

    B, S = 2, 8
    inputs = jax.random.randint(ki, (B, S), 0, args.vocab_size)
    masks = jnp.array([[1.0] * S, [1.0] * 5 + [0.0] * 3], dtype=jnp.float32)

    # Full forward pass (z, cls_logits), all Pallas kernels on the hot path.
    z, cls_logits = jax.block_until_ready(rnp_0908_forward(params, inputs, masks, kg))
    assert z.shape == (B, S, 2)
    assert cls_logits.shape == (B, args.num_class)

    # Per-kernel correctness checks vs. pure-JAX references (same inputs).
    masks_ = masks[..., None]
    emb = jnp.take(params["embedding"], inputs, axis=0) * masks_
    gen_out_p, _ = gru_bidirectional(emb, params["gen"], gru_direction_pallas)
    gen_out_r, _ = gru_bidirectional(emb, params["gen"], gru_direction_ref)
    assert jnp.allclose(gen_out_p, gen_out_r, atol=1e-2, rtol=1e-2)

    gl_p = layernorm_linear_pallas(gen_out_p, params["ln_gamma"], params["ln_beta"],
                                   params["gen_fc_w"], params["gen_fc_b"])
    gl_r = ln_linear_ref(gen_out_p, params["ln_gamma"], params["ln_beta"],
                         params["gen_fc_w"], params["gen_fc_b"])
    assert jnp.allclose(gl_p, gl_r, atol=1e-2, rtol=1e-2)

    cl_p = masked_maxpool_linear_pallas(gen_out_p, masks_,
                                        params["cls_fc_w"], params["cls_fc_b"])
    cl_r = maxpool_fc_ref(gen_out_p, masks_, params["cls_fc_w"], params["cls_fc_b"])
    assert jnp.allclose(cl_p, cl_r, atol=1e-2, rtol=1e-2)

    print("KERNEL_OK")
</pallas_src>

<mosaic_0001>
module attributes {stable_mosaic.version = 11 : i64} {
  func.func @_gru_step_kernel(%arg0: i32, %arg1: memref<1x2x32xf32, #tpu.memory_space<vmem>>, %arg2: memref<32x48xf32, #tpu.memory_space<vmem>>, %arg3: memref<16x48xf32, #tpu.memory_space<vmem>>, %arg4: memref<1x48xf32, #tpu.memory_space<vmem>>, %arg5: memref<1x48xf32, #tpu.memory_space<vmem>>, %arg6: memref<1x2x16xf32, #tpu.memory_space<vmem>>, %arg7: memref<2x16xf32, #tpu.memory_space<vmem>>) attributes {dimension_semantics = [#tpu.dimension_semantics<arbitrary>], iteration_bounds = array<i64: 8>, scalar_prefetch = 0 : i64, scratch_operands = 1 : i64, tpu.core_type = #tpu.core_type<tc>, window_params = [{transform_indices = @transform_0, window_bounds = array<i64: 1, 2, 32>}, {pipeline_mode = #tpu.pipeline_mode<synchronous>, transform_indices = @transform_1, window_bounds = array<i64: 32, 48>}, {pipeline_mode = #tpu.pipeline_mode<synchronous>, transform_indices = @transform_2, window_bounds = array<i64: 16, 48>}, {pipeline_mode = #tpu.pipeline_mode<synchronous>, transform_indices = @transform_3, window_bounds = array<i64: 1, 48>}, {pipeline_mode = #tpu.pipeline_mode<synchronous>, transform_indices = @transform_4, window_bounds = array<i64: 1, 48>}, {transform_indices = @transform_5, window_bounds = array<i64: 1, 2, 16>}]} {
    %c0_i32 = arith.constant 0 : i32
    %0 = arith.cmpi eq, %arg0, %c0_i32 : i32
    %1 = arith.extui %0 : i1 to i32
    %c0_i32_0 = arith.constant 0 : i32
    %2 = arith.cmpi ne, %1, %c0_i32_0 : i32
    scf.if %2 {
      %cst_22 = arith.constant 0.000000e+00 : f32
      %46 = vector.broadcast %cst_22 : f32 to vector<2x16xf32>
      %c0_23 = arith.constant 0 : index
      %c0_24 = arith.constant 0 : index
      %47 = vector.load %arg7[%c0_23, %c0_24] : memref<2x16xf32, #tpu.memory_space<vmem>>, vector<2x16xf32>
      tpu.vector_store %arg7[%c0_23, %c0_24], %46 {strides = array<i32>} : memref<2x16xf32, #tpu.memory_space<vmem>>, vector<2x16xf32>,
    } else {
    }
    %c0 = arith.constant 0 : index
    %c0_1 = arith.constant 0 : index
    %c0_2 = arith.constant 0 : index
    %3 = vector.load %arg1[%c0, %c0_1, %c0_2] : memref<1x2x32xf32, #tpu.memory_space<vmem>>, vector<1x2x32xf32>
    %4 = vector.shape_cast %3 : vector<1x2x32xf32> to vector<2x32xf32>
    %c0_3 = arith.constant 0 : index
    %c0_4 = arith.constant 0 : index
    %5 = vector.load %arg7[%c0_3, %c0_4] : memref<2x16xf32, #tpu.memory_space<vmem>>, vector<2x16xf32>
    %c0_5 = arith.constant 0 : index
    %c0_6 = arith.constant 0 : index
    %6 = vector.load %arg2[%c0_5, %c0_6] : memref<32x48xf32, #tpu.memory_space<vmem>>, vector<32x48xf32>
    %cst = arith.constant dense<0.000000e+00> : vector<2x48xf32>
    %7 = tpu.matmul %4, %6, %cst {dimension_numbers = #tpu.dot_dimension_numbers<[1], [0], [0], [1], [0, 0, 1, 1], [], []>} : vector<2x32xf32>, vector<32x48xf32>, vector<2x48xf32> -> vector<2x48xf32>
    %c0_7 = arith.constant 0 : index
    %c0_8 = arith.constant 0 : index
    %8 = vector.load %arg4[%c0_7, %c0_8] : memref<1x48xf32, #tpu.memory_space<vmem>>, vector<1x48xf32>
    %9 = vector.broadcast %8 : vector<1x48xf32> to vector<2x48xf32>
    %10 = arith.addf %7, %9 : vector<2x48xf32>
    %c0_9 = arith.constant 0 : index
    %c0_10 = arith.constant 0 : index
    %11 = vector.load %arg3[%c0_9, %c0_10] : memref<16x48xf32, #tpu.memory_space<vmem>>, vector<16x48xf32>
    %cst_11 = arith.constant dense<0.000000e+00> : vector<2x48xf32>
    %12 = tpu.matmul %5, %11, %cst_11 {dimension_numbers = #tpu.dot_dimension_numbers<[1], [0], [0], [1], [0, 0, 1, 1], [], []>} : vector<2x16xf32>, vector<16x48xf32>, vector<2x48xf32> -> vector<2x48xf32>
    %c0_12 = arith.constant 0 : index
    %c0_13 = arith.constant 0 : index
    %13 = vector.load %arg5[%c0_12, %c0_13] : memref<1x48xf32, #tpu.memory_space<vmem>>, vector<1x48xf32>
    %14 = vector.broadcast %13 : vector<1x48xf32> to vector<2x48xf32>
    %15 = arith.addf %12, %14 : vector<2x48xf32>
    %16 = vector.extract_strided_slice %10 {offsets = [0, 0], sizes = [2, 16], strides = [1, 1]} : vector<2x48xf32> to vector<2x16xf32>
    %17 = vector.extract_strided_slice %15 {offsets = [0, 0], sizes = [2, 16], strides = [1, 1]} : vector<2x48xf32> to vector<2x16xf32>
    %18 = arith.addf %16, %17 : vector<2x16xf32>
    %19 = arith.negf %18 : vector<2x16xf32>
    %20 = math.exp %19 : vector<2x16xf32>
    %cst_14 = arith.constant 1.000000e+00 : f32
    %21 = vector.broadcast %cst_14 : f32 to vector<2x16xf32>
    %22 = arith.addf %21, %20 : vector<2x16xf32>
    %23 = arith.divf %21, %22 : vector<2x16xf32>
    %24 = vector.extract_strided_slice %10 {offsets = [0, 16], sizes = [2, 16], strides = [1, 1]} : vector<2x48xf32> to vector<2x16xf32>
    %25 = vector.extract_strided_slice %15 {offsets = [0, 16], sizes = [2, 16], strides = [1, 1]} : vector<2x48xf32> to vector<2x16xf32>
    %26 = arith.addf %24, %25 : vector<2x16xf32>
    %27 = arith.negf %26 : vector<2x16xf32>
    %28 = math.exp %27 : vector<2x16xf32>
    %cst_15 = arith.constant 1.000000e+00 : f32
    %29 = vector.broadcast %cst_15 : f32 to vector<2x16xf32>
    %30 = arith.addf %29, %28 : vector<2x16xf32>
    %31 = arith.divf %29, %30 : vector<2x16xf32>
    %32 = vector.extract_strided_slice %10 {offsets = [0, 32], sizes = [2, 16], strides = [1, 1]} : vector<2x48xf32> to vector<2x16xf32>
    %33 = vector.extract_strided_slice %15 {offsets = [0, 32], sizes = [2, 16], strides = [1, 1]} : vector<2x48xf32> to vector<2x16xf32>
    %34 = arith.mulf %23, %33 : vector<2x16xf32>
    %35 = arith.addf %32, %34 : vector<2x16xf32>
    %36 = math.tanh %35 : vector<2x16xf32>
    %cst_16 = arith.constant 1.000000e+00 : f32
    %37 = vector.broadcast %cst_16 : f32 to vector<2x16xf32>
    %38 = arith.subf %37, %31 : vector<2x16xf32>
    %39 = arith.mulf %38, %36 : vector<2x16xf32>
    %40 = arith.mulf %31, %5 : vector<2x16xf32>
    %41 = arith.addf %39, %40 : vector<2x16xf32>
    %c0_17 = arith.constant 0 : index
    %c0_18 = arith.constant 0 : index
    %42 = vector.load %arg7[%c0_17, %c0_18] : memref<2x16xf32, #tpu.memory_space<vmem>>, vector<2x16xf32>
    tpu.vector_store %arg7[%c0_17, %c0_18], %41 {strides = array<i32>} : memref<2x16xf32, #tpu.memory_space<vmem>>, vector<2x16xf32>,
    %c0_19 = arith.constant 0 : index
    %c0_20 = arith.constant 0 : index
    %c0_21 = arith.constant 0 : index
    %43 = vector.load %arg6[%c0_19, %c0_20, %c0_21] : memref<1x2x16xf32, #tpu.memory_space<vmem>>, vector<1x2x16xf32>
    %44 = vector.shape_cast %43 : vector<1x2x16xf32> to vector<2x16xf32>
    %45 = vector.shape_cast %41 : vector<2x16xf32> to vector<1x2x16xf32>
    tpu.vector_store %arg6[%c0_19, %c0_20, %c0_21], %45 {strides = array<i32>} : memref<1x2x16xf32, #tpu.memory_space<vmem>>, vector<1x2x16xf32>,
    return
  }
  func.func @transform_0(%arg0: i32) -> (i32, i32, i32) {
    %c0_i32 = arith.constant 0 : i32
    %c0_i32_0 = arith.constant 0 : i32
    %c0_i32_1 = arith.constant 0 : i32
    return %arg0, %c0_i32, %c0_i32_0 : i32, i32, i32
  }
  func.func @transform_1(%arg0: i32) -> (i32, i32) {
    %c0_i32 = arith.constant 0 : i32
    %c0_i32_0 = arith.constant 0 : i32
    %c0_i32_1 = arith.constant 0 : i32
    return %c0_i32, %c0_i32_0 : i32, i32
  }
  func.func @transform_2(%arg0: i32) -> (i32, i32) {
    %c0_i32 = arith.constant 0 : i32
    %c0_i32_0 = arith.constant 0 : i32
    %c0_i32_1 = arith.constant 0 : i32
    return %c0_i32, %c0_i32_0 : i32, i32
  }
  func.func @transform_3(%arg0: i32) -> (i32, i32) {
    %c0_i32 = arith.constant 0 : i32
    %c0_i32_0 = arith.constant 0 : i32
    %c0_i32_1 = arith.constant 0 : i32
    return %c0_i32, %c0_i32_0 : i32, i32
  }
  func.func @transform_4(%arg0: i32) -> (i32, i32) {
    %c0_i32 = arith.constant 0 : i32
    %c0_i32_0 = arith.constant 0 : i32
    %c0_i32_1 = arith.constant 0 : i32
    return %c0_i32, %c0_i32_0 : i32, i32
  }
  func.func @transform_5(%arg0: i32) -> (i32, i32, i32) {
    %c0_i32 = arith.constant 0 : i32
    %c0_i32_0 = arith.constant 0 : i32
    %c0_i32_1 = arith.constant 0 : i32
    return %arg0, %c0_i32, %c0_i32_0 : i32, i32, i32
  }
}

</mosaic_0001>

<llo_original>
// kernel: tpu_custom_call.1
$region0: #{tpu_custom_call.1}
  #allocation0 [shape = 'u32[]', space=smem, size = 0x4, offset = 0x4, fixed_abs, tag = 'smem constant byte address 0x4 - core index']
  #allocation1 [shape = 'u32[144,128]{1,0:T(1,128)}', space=vmem, size = 0x12000, scoped, tag = 'internal scratch']
  #allocation2 [shape = 'f32[2,16]{1,0:T(2,128)}', space=vmem, size = 0x400, scoped, tag = 'scratch operand']
  %s0 = inlined_call_operand.hbm [shape: f32[8,2,32], index: 0, kind: input, shape index: {}]
  %s1 = inlined_call_operand.hbm [shape: f32[32,48], index: 1, kind: input, shape index: {}]
  %s2 = inlined_call_operand.hbm [shape: f32[16,48], index: 2, kind: input, shape index: {}]
  %s3 = inlined_call_operand.vmem [shape: f32[1,48], index: 3, kind: input, shape index: {}]
  %s4 = inlined_call_operand.vmem [shape: f32[1,48], index: 4, kind: input, shape index: {}]
  %s5 = inlined_call_operand.hbm [shape: f32[8,2,16], index: 5, kind: output, shape index: {}]
  %s6 = sld [smem:[#allocation0]]
  $region69: #{tpu_custom_call.1} parent=0
    _
  %s8 = ssub.s32 1, %s6
  %s9 = scalar_select 0, %s8, %s6
  $region1: #{tpu_custom_call.1} parent=0
    #allocation3 [shape = 'u8[2048]{0}', space=vmem, size = 0x800, scoped, tag = 'input window, operand 0']
    #allocation4 [shape = 's32[2]{0}', space=sflag, size = 0x8, scoped, tag = 'scoped memory for tpu_custom_call.1']
    #allocation5 [shape = 's32[2]{0}', space=sflag, size = 0x8, scoped, tag = 'scoped memory for tpu_custom_call.1']
    #allocation6 [shape = 'u8[16384]{0}', space=vmem, size = 0x4000, scoped, tag = 'input window, operand 1, single buffered']
    #allocation7 [shape = 's32[1]{0}', space=sflag, size = 0x4, scoped, tag = 'scoped memory for tpu_custom_call.1']
    #allocation8 [shape = 'u8[8192]{0}', space=vmem, size = 0x2000, scoped, tag = 'input window, operand 2, single buffered']
    #allocation9 [shape = 'u8[2048]{0}', space=vmem, size = 0x800, scoped, tag = 'output window, operand 0']
    %10 = vsyncpa [#allocation4], 0
    %s11 = scalar_lea.sflag [#allocation4], 1
    %12 = vsyncpa %s11, 0
    %13 = vsyncpa [#allocation7], 0
    %14 = vsyncpa [#allocation5], 0
    %s15 = scalar_lea.sflag [#allocation5], 1
    %16 = vsyncpa %s15, 0
    loop: start=0, step=1, limit=10
    $region2: #{tpu_custom_call.1} parent=1 // loop_pre_header
      _
    $region3: #{tpu_custom_call.1} parent=1 // loop_header
      %s18 = sphi 0, %s22
      %p19 = scmp.ge.s32.totalorder %s18, 10
      %s28 = sphi 0, %s30
      %s31 = sphi 0, %s28
      %s32 = sphi 0, %s31
      %s48 = sphi 0, %s32
      %s52 = sphi 0, %s52
      %s54 = sphi 0, %s52
      %s55 = sphi 0, %s54
      %s69 = sphi 0, %s55
      %s73 = sphi 0, %s73
      %s75 = sphi 0, %s73
      %s76 = sphi 0, %s75
      %s90 = sphi 0, %s76
      %s94 = sphi 0, %s94
      %s96 = sphi 0, %s94
      %s97 = sphi 0, %s96
      %s111 = sphi 0, %s97
      %s115 = sphi 0, %s115
      %s117 = sphi 0, %s115
      %s118 = sphi 0, %s117
      %s132 = sphi 0, %s118
      %s138 = sphi 0, %s140
      %s141 = sphi 0, %s138
      %s142 = sphi 0, %s141
      %s158 = sphi 0, %s142
    $region4: #{tpu_custom_call.1} parent=1 // loop_header_branch
      %21 = sbr.rel (%p19) target = $region8
    $region5: #{tpu_custom_call.1} parent=1 // loop_body
      %s23 = ssub.s32 %s18, 1
      %s24 = ssub.s32 %s18, 2
      %s25 = sadd.s32 %s18, 1
      %s26 = ssub.s32 %s18, %s25
      %p27 = scmp.eq.s32.totalorder %s26, 0
      %s29 = sadd.s32 %s28, 1
      %s30 = scalar_select %p27, %s28, %s29
      %p33 = pneg %p27
      %p34 = scmp.eq.s32.totalorder %s18, 7
      %p35 = por %p33, %p34
      %p36 = scmp.ne.s32.totalorder %s28, %s31
      %p37 = scmp.eq.s32.totalorder %s18, 0
      %p38 = por %p36, %p37
      %p39 = scmp.ne.s32.totalorder %s28, %s31
      %p40 = scmp.eq.s32.totalorder %s23, 7
      %p41 = por %p39, %p40
      %p42 = scmp.ne.s32.totalorder %s31, %s32
      %p43 = scmp.eq.s32.totalorder %s23, 0
      %p44 = por %p42, %p43
      %p45 = scmp.ne.s32.totalorder %s31, %s32
      %p46 = scmp.eq.s32.totalorder %s24, 7
      %p47 = por %p45, %p46
      %p49 = scmp.ne.s32.totalorder %s32, %s48
      %p50 = scmp.eq.s32.totalorder %s24, 0
      %p51 = por %p49, %p50
      %s53 = sadd.s32 %s52, 1
      %p56 = scmp.eq.s32.totalorder %s18, 7
      %p57 = scmp.ne.s32.totalorder %s52, %s54
      %p58 = scmp.eq.s32.totalorder %s18, 0
      %p59 = por %p57, %p58
      %p60 = scmp.ne.s32.totalorder %s52, %s54
      %p61 = scmp.eq.s32.totalorder %s23, 7
      %p62 = por %p60, %p61
      %p63 = scmp.ne.s32.totalorder %s54, %s55
      %p64 = scmp.eq.s32.totalorder %s23, 0
      %p65 = por %p63, %p64
      %p66 = scmp.ne.s32.totalorder %s54, %s55
      %p67 = scmp.eq.s32.totalorder %s24, 7
      %p68 = por %p66, %p67
      %p70 = scmp.ne.s32.totalorder %s55, %s69
      %p71 = scmp.eq.s32.totalorder %s24, 0
      %p72 = por %p70, %p71
      %s74 = sadd.s32 %s73, 1
      %p77 = scmp.eq.s32.totalorder %s18, 7
      %p78 = scmp.ne.s32.totalorder %s73, %s75
      %p79 = scmp.eq.s32.totalorder %s18, 0
      %p80 = por %p78, %p79
      %p81 = scmp.ne.s32.totalorder %s73, %s75
      %p82 = scmp.eq.s32.totalorder %s23, 7
      %p83 = por %p81, %p82
      %p84 = scmp.ne.s32.totalorder %s75, %s76
      %p85 = scmp.eq.s32.totalorder %s23, 0
      %p86 = por %p84, %p85
      %p87 = scmp.ne.s32.totalorder %s75, %s76
      %p88 = scmp.eq.s32.totalorder %s24, 7
      %p89 = por %p87, %p88
      %p91 = scmp.ne.s32.totalorder %s76, %s90
      %p92 = scmp.eq.s32.totalorder %s24, 0
      %p93 = por %p91, %p92
      %s95 = sadd.s32 %s94, 1
      %p98 = scmp.eq.s32.totalorder %s18, 7
      %p99 = scmp.ne.s32.totalorder %s94, %s96
      %p100 = scmp.eq.s32.totalorder %s18, 0
      %p101 = por %p99, %p100
      %p102 = scmp.ne.s32.totalorder %s94, %s96
      %p103 = scmp.eq.s32.totalorder %s23, 7
      %p104 = por %p102, %p103
      %p105 = scmp.ne.s32.totalorder %s96, %s97
      %p106 = scmp.eq.s32.totalorder %s23, 0
      %p107 = por %p105, %p106
      %p108 = scmp.ne.s32.totalorder %s96, %s97
      %p109 = scmp.eq.s32.totalorder %s24, 7
      %p110 = por %p108, %p109
      %p112 = scmp.ne.s32.totalorder %s97, %s111
      %p113 = scmp.eq.s32.totalorder %s24, 0
      %p114 = por %p112, %p113
      %s116 = sadd.s32 %s115, 1
      %p119 = scmp.eq.s32.totalorder %s18, 7
      %p120 = scmp.ne.s32.totalorder %s115, %s117
      %p121 = scmp.eq.s32.totalorder %s18, 0
      %p122 = por %p120, %p121
      %p123 = scmp.ne.s32.totalorder %s115, %s117
      %p124 = scmp.eq.s32.totalorder %s23, 7
      %p125 = por %p123, %p124
      %p126 = scmp.ne.s32.totalorder %s117, %s118
      %p127 = scmp.eq.s32.totalorder %s23, 0
      %p128 = por %p126, %p127
      %p129 = scmp.ne.s32.totalorder %s117, %s118
      %p130 = scmp.eq.s32.totalorder %s24, 7
      %p131 = por %p129, %p130
      %p133 = scmp.ne.s32.totalorder %s118, %s132
      %p134 = scmp.eq.s32.totalorder %s24, 0
      %p135 = por %p133, %p134
      %s136 = ssub.s32 %s18, %s25
      %p137 = scmp.eq.s32.totalorder %s136, 0
      %s139 = sadd.s32 %s138, 1
      %s140 = scalar_select %p137, %s138, %s139
      %p143 = pneg %p137
      %p144 = scmp.eq.s32.totalorder %s18, 7
      %p145 = por %p143, %p144
      %p146 = scmp.ne.s32.totalorder %s138, %s141
      %p147 = scmp.eq.s32.totalorder %s18, 0
      %p148 = por %p146, %p147
      %p149 = scmp.ne.s32.totalorder %s138, %s141
      %p150 = scmp.eq.s32.totalorder %s23, 7
      %p151 = por %p149, %p150
      %p152 = scmp.ne.s32.totalorder %s141, %s142
      %p153 = scmp.eq.s32.totalorder %s23, 0
      %p154 = por %p152, %p153
      %p155 = scmp.ne.s32.totalorder %s141, %s142
      %p156 = scmp.eq.s32.totalorder %s24, 7
      %p157 = por %p155, %p156
      %p159 = scmp.ne.s32.totalorder %s142, %s158
      %p160 = scmp.eq.s32.totalorder %s24, 0
      %p161 = por %p159, %p160
      %p162 = scmp.le.s32.totalorder 1, %s18
      %p163 = scmp.lt.s32.totalorder %s18, 9
      %p164 = pnand %p162, %p163
      %p165 = pneg %p164
      // Predicated region
      $region9: #{tpu_custom_call.1} parent=5 // pred_check
        _
      $region10: #{tpu_custom_call.1} parent=5 // pred_check_branch
        %167 = sbr.rel (%p164) target = $region12
      $region11: #{tpu_custom_call.1} parent=5 // pred_region
        %s168 = ssub.s32 %s18, 1
        // Predicated region
        $region13: #{tpu_custom_call.1} parent=11 // pred_check
          %p169 = pneg %p65
        $region14: #{tpu_custom_call.1} parent=11 // pred_check_branch
          %171 = sbr.rel (%p169) target = $region16
        $region15: #{tpu_custom_call.1} parent=11 // pred_region
          %s173 = ssub.s32 512, 512
          %174 = vsyncadd [#allocation7], %s173
          %s175 = sshll.u32 [#allocation6], 4
          %s176 = int_to_ptr.vmem [resolvable:$true] %s175
          %181 = dma.hbm_to_vmem [thread:$0]  %s1, 512, %s176, [#allocation7], 128, 128, 8
        $region16: #{tpu_custom_call.1} parent=11 // pred_fallthru
          _
        // Predicated region
        $region17: #{tpu_custom_call.1} parent=11 // pred_check
          %p182 = pneg %p86
        $region18: #{tpu_custom_call.1} parent=11 // pred_check_branch
          %184 = sbr.rel (%p182) target = $region20
        $region19: #{tpu_custom_call.1} parent=11 // pred_region
          %s186 = ssub.s32 256, 256
          %187 = vsyncadd [#allocation7], %s186
          %s188 = sshll.u32 [#allocation8], 4
          %s189 = int_to_ptr.vmem [resolvable:$true] %s188
          %194 = dma.hbm_to_vmem [thread:$0]  %s2, 256, %s189, [#allocation7], 128, 128, 8
        $region20: #{tpu_custom_call.1} parent=11 // pred_fallthru
          _
        // Predicated region
        $region21: #{tpu_custom_call.1} parent=11 // pred_check
          %p195 = pneg %p107
        $region22: #{tpu_custom_call.1} parent=11 // pred_check_branch
          %197 = sbr.rel (%p195) target = $region24
        $region23: #{tpu_custom_call.1} parent=11 // pred_region
          _
        $region24: #{tpu_custom_call.1} parent=11 // pred_fallthru
          _
        // Predicated region
        $region25: #{tpu_custom_call.1} parent=11 // pred_check
          %p198 = pneg %p128
        $region26: #{tpu_custom_call.1} parent=11 // pred_check_branch
          %200 = sbr.rel (%p198) target = $region28
        $region27: #{tpu_custom_call.1} parent=11 // pred_region
          _
        $region28: #{tpu_custom_call.1} parent=11 // pred_fallthru
          _
      $region12: #{tpu_custom_call.1} parent=5 // pred_fallthru
        _
      %p201 = scmp.lt.s32.totalorder %s18, 8
      // Predicated region
      $region29: #{tpu_custom_call.1} parent=5 // pred_check
        %p202 = pneg %p201
      $region30: #{tpu_custom_call.1} parent=5 // pred_check_branch
        %204 = sbr.rel (%p202) target = $region32
      $region31: #{tpu_custom_call.1} parent=5 // pred_region
        // Predicated region
        $region33: #{tpu_custom_call.1} parent=31 // pred_check
          %p205 = pneg %p38
        $region34: #{tpu_custom_call.1} parent=31 // pred_check_branch
          %207 = sbr.rel (%p205) target = $region36
        $region35: #{tpu_custom_call.1} parent=31 // pred_region
          %s208 = sand.u32 %s28, 1
          %s209 = scalar_lea.sflag [#allocation4], %s208
          %s210 = sand.u32 %s28, 1
          %s211 = smul.addr %s210, 2
          %s212 = scalar_lea.vmem [#allocation3], %s211
          %s214 = ssub.s32 32, 32
          %215 = vsyncadd %s209, %s214
          %s216 = smul.addr %s18, 32
          %s217 = scalar_lea.hbm %s0, %s216
          %s219 = sshll.u32 %s212, 4
          %s220 = int_to_ptr.vmem [resolvable:$true] %s219
          %222 = dma.hbm_to_vmem [thread:$0]  %s217, 32, %s220, %s209
        $region36: #{tpu_custom_call.1} parent=31 // pred_fallthru
          _
      $region32: #{tpu_custom_call.1} parent=5 // pred_fallthru
        _
      %p223 = scmp.le.s32.totalorder 1, %s18
      %p224 = scmp.lt.s32.totalorder %s18, 9
      %p225 = pnand %p223, %p224
      %p226 = pneg %p225
      // Predicated region
      $region37: #{tpu_custom_call.1} parent=5 // pred_check
        _
      $region38: #{tpu_custom_call.1} parent=5 // pred_check_branch
        %228 = sbr.rel (%p225) target = $region40
      $region39: #{tpu_custom_call.1} parent=5 // pred_region
        %s229 = ssub.s32 %s18, 1
        %s230 = sand.u32 %s31, 1
        %s231 = scalar_lea.sflag [#allocation4], %s230
        %s232 = sand.u32 %s31, 1
        %s233 = smul.addr %s232, 2
        %s234 = scalar_lea.vmem [#allocation3], %s233
        // Predicated region
        $region41: #{tpu_custom_call.1} parent=39 // pred_check
          %p235 = pneg %p44
        $region42: #{tpu_custom_call.1} parent=39 // pred_check_branch
          %237 = sbr.rel (%p235) target = $region44
        $region43: #{tpu_custom_call.1} parent=39 // pred_region
          %238 = dma.done %s231, 32
        $region44: #{tpu_custom_call.1} parent=39 // pred_fallthru
          _
        // Predicated region
        $region45: #{tpu_custom_call.1} parent=39 // pred_check
          %p239 = pneg %p65
        $region46: #{tpu_custom_call.1} parent=39 // pred_check_branch
          %241 = sbr.rel (%p239) target = $region48
        $region47: #{tpu_custom_call.1} parent=39 // pred_region
          %242 = dma.done [#allocation7], 512
        $region48: #{tpu_custom_call.1} parent=39 // pred_fallthru
          _
        // Predicated region
        $region49: #{tpu_custom_call.1} parent=39 // pred_check
          %p243 = pneg %p86
        $region50: #{tpu_custom_call.1} parent=39 // pred_check_branch
          %245 = sbr.rel (%p243) target = $region52
        $region51: #{tpu_custom_call.1} parent=39 // pred_region
          %246 = dma.done [#allocation7], 256
        $region52: #{tpu_custom_call.1} parent=39 // pred_fallthru
          _
        %s247 = sand.u32 %s31, 1
        %s248 = scalar_lea.sflag [#allocation4], %s247
        %s249 = sand.u32 %s31, 1
        %s250 = smul.addr %s249, 2
        %s251 = scalar_lea.vmem [#allocation3], %s250
        %p252 = pneg %p44
        %p253 = pneg %p41
        %p254 = pneg %p65
        %p255 = pneg %p62
        %p256 = pneg %p86
        %p257 = pneg %p83
        %p258 = pneg %p107
        %p259 = pneg %p104
        %p260 = pneg %p128
        %p261 = pneg %p125
        %p262 = pneg %p154
        %p263 = pneg %p151
        %s264 = sand.u32 %s141, 1
        %s265 = scalar_lea.sflag [#allocation5], %s264
        %s266 = sand.u32 %s141, 1
        %s267 = smul.addr %s266, 2
        %s268 = scalar_lea.vmem [#allocation9], %s267
        %p269 = scmp.eq.s32.totalorder %s23, 0
        // Predicated region
        $region53: #{tpu_custom_call.1} parent=39 // pred_check
          %p270 = pneg %p269
        $region54: #{tpu_custom_call.1} parent=39 // pred_check_branch
          %272 = sbr.rel (%p270) target = $region56
        $region55: #{tpu_custom_call.1} parent=39 // pred_region
          %vm273 = vcmask 123904
          %274 = vst.msk [vmem:[#allocation2] sm:$0x3] %vm273, 0.0
        $region56: #{tpu_custom_call.1} parent=39 // pred_fallthru
          _
        %v275 = vld [vmem:[%s234] sm:$0x3]
        %v276 = vld [vmem:[#allocation2] sm:$0x3]
        %v277 = vld [vmem:[#allocation6] sm:$0xff]
        %v278 = vld [vmem:[#allocation6 + $0x8] sm:$0xff]
        %v279 = vld [vmem:[#allocation6 + $0x10] sm:$0xff]
        %v280 = vld [vmem:[#allocation6 + $0x18] sm:$0xff]
        %v281 = vld [vmem:[%s3] sm:$0x1]
        %v283 = vlaneseq
        %v284 = vshrl.u32 %v283, 7
        %v285 = vsub.s32 0, %v284
        %v286 = vrot.slane %v281, %v285
        %vm288 = vcmask 261120
        %v290 = vsel %vm288, %v275, 0
        %292 = vmatprep.subr.mxu0 0.0
        %293 = vmatpush1.msra.mxu0 %v277
        %294 = vmatprep.subr.mxu0 0.0
        %295 = vmatpush1.msra.mxu0 %v278
        %296 = vmatprep.subr.mxu0 0.0
        %297 = vmatpush1.msra.mxu0 %v279
        %298 = vmatprep.subr.mxu0 0.0
        %299 = vmatpush1.msra.mxu0 %v280
        %300 = vmatprep.subr.mxu0 0.0
        %301 = vmatpush1.msra.mxu0 0.0
        %302 = vmatprep.subr.mxu0 0.0
        %303 = vmatpush1.msra.mxu0 0.0
        %304 = vmatprep.subr.mxu0 0.0
        %305 = vmatpush1.msra.mxu0 0.0
        %306 = vmatprep.subr.mxu0 0.0
        %307 = vmatpush1.msra.mxu0 0.0
        %308 = vmatprep.subr.mxu0 0.0
        %309 = vmatpush1.msra.mxu0 0.0
        %310 = vmatprep.subr.mxu0 0.0
        %311 = vmatpush1.msra.mxu0 0.0
        %312 = vmatprep.subr.mxu0 0.0
        %313 = vmatpush1.msra.mxu0 0.0
        %314 = vmatprep.subr.mxu0 0.0
        %315 = vmatpush1.msra.mxu0 0.0
        %316 = vmatprep.subr.mxu0 0.0
        %317 = vmatpush1.msra.mxu0 0.0
        %318 = vmatprep.subr.mxu0 0.0
        %319 = vmatpush1.msra.mxu0 0.0
        %320 = vmatprep.subr.mxu0 0.0
        %321 = vmatpush1.msra.mxu0 0.0
        %322 = vmatprep.subr.mxu0 0.0
        %323 = vmatpush1.msra.mxu0 0.0
        %324 = vmatprep.subr.mxu0 0.0
        %325 = vmatpush1.msra.mxu0 0.0
        %326 = vmatprep.subr.mxu0 0.0
        %327 = vmatpush1.msra.mxu0 0.0
        %328 = vmatprep.subr.mxu0 0.0
        %329 = vmatpush1.msra.mxu0 0.0
        %330 = vmatprep.subr.mxu0 0.0
        %331 = vmatpush1.msra.mxu0 0.0
        %332 = vmatprep.subr.mxu0 0.0
        %333 = vmatpush1.msra.mxu0 0.0
        %334 = vmatprep.subr.mxu0 0.0
        %335 = vmatpush1.msra.mxu0 0.0
        %336 = vmatprep.subr.mxu0 0.0
        %337 = vmatpush1.msra.mxu0 0.0
        %338 = vmatprep.subr.mxu0 0.0
        %339 = vmatpush1.msra.mxu0 0.0
        %340 = vmatprep.subr.mxu0 0.0
        %341 = vmatpush1.msra.mxu0 0.0
        %342 = vmatprep.subr.mxu0 0.0
        %343 = vmatpush1.msra.mxu0 0.0
        %344 = vmatprep.subr.mxu0 0.0
        %345 = vmatpush1.msra.mxu0 0.0
        %346 = vmatprep.subr.mxu0 0.0
        %347 = vmatpush1.msra.mxu0 0.0
        %348 = vmatprep.subr.mxu0 0.0
        %349 = vmatpush1.msra.mxu0 0.0
        %350 = vmatprep.subr.mxu0 0.0
        %351 = vmatpush1.msra.mxu0 0.0
        %352 = vmatprep.subr.mxu0 0.0
        %353 = vmatpush1.msra.mxu0 0.0
        %354 = vmatprep.subr.mxu0 0.0
        %355 = vmatpush1.msra.mxu0 0.0
        %356 = vmatprep.mubr.f32.mxu0 0.0
        %357 = vmatmul.mubr.f32.gmra.mrb[0].mxu0 %v290
        %v358 = vpop.f32.mrb[0].mxu0
        %v359 = vadd.f32 %v286, %v358
        %v360 = vpop.f32.mrb[0].mxu0
        %361 = vdwg.mxu0
        %v362 = vld [vmem:[#allocation8] sm:$0xff]
        %v363 = vld [vmem:[#allocation8 + $0x8] sm:$0xff]
        %v364 = vld [vmem:[%s4] sm:$0x1]
        %v366 = vlaneseq
        %v367 = vshrl.u32 %v366, 7
        %v368 = vsub.s32 0, %v367
        %v369 = vrot.slane %v364, %v368
        %vm371 = vcmask 130048
        %v373 = vsel %vm371, %v276, 0
        %375 = vmatprep.subr.mxu0 0.0
        %376 = vmatpush1.msra.mxu0 %v362
        %377 = vmatprep.subr.mxu0 0.0
        %378 = vmatpush1.msra.mxu0 %v363
        %379 = vmatprep.subr.mxu0 0.0
        %380 = vmatpush1.msra.mxu0 0.0
        %381 = vmatprep.subr.mxu0 0.0
        %382 = vmatpush1.msra.mxu0 0.0
        %383 = vmatprep.subr.mxu0 0.0
        %384 = vmatpush1.msra.mxu0 0.0
        %385 = vmatprep.subr.mxu0 0.0
        %386 = vmatpush1.msra.mxu0 0.0
        %387 = vmatprep.subr.mxu0 0.0
        %388 = vmatpush1.msra.mxu0 0.0
        %389 = vmatprep.subr.mxu0 0.0
        %390 = vmatpush1.msra.mxu0 0.0
        %391 = vmatprep.subr.mxu0 0.0
        %392 = vmatpush1.msra.mxu0 0.0
        %393 = vmatprep.subr.mxu0 0.0
        %394 = vmatpush1.msra.mxu0 0.0
        %395 = vmatprep.subr.mxu0 0.0
        %396 = vmatpush1.msra.mxu0 0.0
        %397 = vmatprep.subr.mxu0 0.0
        %398 = vmatpush1.msra.mxu0 0.0
        %399 = vmatprep.subr.mxu0 0.0
        %400 = vmatpush1.msra.mxu0 0.0
        %401 = vmatprep.subr.mxu0 0.0
        %402 = vmatpush1.msra.mxu0 0.0
        %403 = vmatprep.subr.mxu0 0.0
        %404 = vmatpush1.msra.mxu0 0.0
        %405 = vmatprep.subr.mxu0 0.0
        %406 = vmatpush1.msra.mxu0 0.0
        %407 = vmatprep.subr.mxu0 0.0
        %408 = vmatpush1.msra.mxu0 0.0
        %409 = vmatprep.subr.mxu0 0.0
        %410 = vmatpush1.msra.mxu0 0.0
        %411 = vmatprep.subr.mxu0 0.0
        %412 = vmatpush1.msra.mxu0 0.0
        %413 = vmatprep.subr.mxu0 0.0
        %414 = vmatpush1.msra.mxu0 0.0
        %415 = vmatprep.subr.mxu0 0.0
        %416 = vmatpush1.msra.mxu0 0.0
        %417 = vmatprep.subr.mxu0 0.0
        %418 = vmatpush1.msra.mxu0 0.0
        %419 = vmatprep.subr.mxu0 0.0
        %420 = vmatpush1.msra.mxu0 0.0
        %421 = vmatprep.subr.mxu0 0.0
        %422 = vmatpush1.msra.mxu0 0.0
        %423 = vmatprep.subr.mxu0 0.0
        %424 = vmatpush1.msra.mxu0 0.0
        %425 = vmatprep.subr.mxu0 0.0
        %426 = vmatpush1.msra.mxu0 0.0
        %427 = vmatprep.subr.mxu0 0.0
        %428 = vmatpush1.msra.mxu0 0.0
        %429 = vmatprep.subr.mxu0 0.0
        %430 = vmatpush1.msra.mxu0 0.0
        %431 = vmatprep.subr.mxu0 0.0
        %432 = vmatpush1.msra.mxu0 0.0
        %433 = vmatprep.subr.mxu0 0.0
        %434 = vmatpush1.msra.mxu0 0.0
        %435 = vmatprep.subr.mxu0 0.0
        %436 = vmatpush1.msra.mxu0 0.0
        %437 = vmatprep.subr.mxu0 0.0
        %438 = vmatpush1.msra.mxu0 0.0
        %439 = vmatprep.mubr.f32.mxu0 0.0
        %440 = vmatmul.mubr.f32.gmra.mrb[0].mxu0 %v373
        %v441 = vpop.f32.mrb[0].mxu0
        %v442 = vadd.f32 %v369, %v441
        %v443 = vpop.f32.mrb[0].mxu0
        %444 = vdwg.mxu0
        %v445 = vadd.f32 %v359, %v442
        %v446 = vxor.u32 %v445, 2147483648
        %v447 = vmul.f32 %v446, 1.442695
        %v448 = vpow.pop %v447
        %v449 = vadd.f32 %v448, 1.0
        %v450 = vrcp.pop %v449
        %v451 = vmul.f32 1.0, %v450
        %453 = vrot.lane.b32.xlu0 %v442, 96
        %v454 = vpop.permute.xlu0 %453
        %v456 = vmul.f32 %v451, %v454
        %458 = vrot.lane.b32.xlu0 %v456, 32
        %v459 = vpop.permute.xlu0 %458
        %v461 = vadd.f32 %v359, %v459
        %v462 = vtanh.pop %v461
        %v463 = vsub.f32 1.0, %v451
        %465 = vrot.lane.b32.xlu0 %v462, 112
        %v466 = vpop.permute.xlu0 %465
        %v468 = vmul.f32 %v463, %v466
        %469 = vrot.lane.b32.xlu0 %v276, 16
        %v470 = vpop.permute.xlu0 %469
        %v472 = vmul.f32 %v451, %v470
        %v473 = vadd.f32 %v468, %v472
        %475 = vrot.lane.b32.xlu0 %v473, 112
        %v476 = vpop.permute.xlu0 %475
        %vm478 = vcmask 123904
        %479 = vst.msk [vmem:[#allocation2] sm:$0x3] %vm478, %v476
        %480 = vst.msk [vmem:[%s268] sm:$0x3] %vm478, %v476
        %s481 = sand.u32 %s141, 1
        %s482 = scalar_lea.sflag [#allocation5], %s481
        %s483 = sand.u32 %s141, 1
        %s484 = smul.addr %s483, 2
        %s485 = scalar_lea.vmem [#allocation9], %s484
        // Predicated region
        $region57: #{tpu_custom_call.1} parent=39 // pred_check
          %p486 = pneg %p151
        $region58: #{tpu_custom_call.1} parent=39 // pred_check_branch
          %488 = sbr.rel (%p486) target = $region60
        $region59: #{tpu_custom_call.1} parent=39 // pred_region
          %s490 = ssub.s32 32, 32
          %491 = vsyncadd %s482, %s490
          %s492 = smul.addr %s23, 32
          %s493 = scalar_lea.hbm %s5, %s492
          %s495 = sshll.u32 %s485, 4
          %s496 = int_to_ptr.vmem [resolvable:$true] %s495
          %498 = dma.vmem_to_hbm [thread:$0]  %s496, 32, %s493, %s482
        $region60: #{tpu_custom_call.1} parent=39 // pred_fallthru
          _
      $region40: #{tpu_custom_call.1} parent=5 // pred_fallthru
        _
      %p499 = scmp.le.s32.totalorder 2, %s18
      // Predicated region
      $region61: #{tpu_custom_call.1} parent=5 // pred_check
        %p500 = pneg %p499
      $region62: #{tpu_custom_call.1} parent=5 // pred_check_branch
        %502 = sbr.rel (%p500) target = $region64
      $region63: #{tpu_custom_call.1} parent=5 // pred_region
        %s503 = ssub.s32 %s18, 2
        // Predicated region
        $region65: #{tpu_custom_call.1} parent=63 // pred_check
          %p504 = pneg %p157
        $region66: #{tpu_custom_call.1} parent=63 // pred_check_branch
          %506 = sbr.rel (%p504) target = $region68
        $region67: #{tpu_custom_call.1} parent=63 // pred_region
          %s507 = sand.u32 %s142, 1
          %s508 = scalar_lea.sflag [#allocation5], %s507
          %s509 = sand.u32 %s142, 1
          %s510 = smul.addr %s509, 2
          %s511 = scalar_lea.vmem [#allocation9], %s510
          %512 = dma.done %s508, 32
        $region68: #{tpu_custom_call.1} parent=63 // pred_fallthru
          _
      $region64: #{tpu_custom_call.1} parent=5 // pred_fallthru
        _
    $region6: #{tpu_custom_call.1} parent=1 // loop_footer
      %s22 = sadd.s32 1, %s18
    $region7: #{tpu_custom_call.1} parent=1 // loop_footer_branch
      %17 = sbr.rel target = $region3
    $region8: #{tpu_custom_call.1} parent=1 // loop_exit
      _
    %513 = vsyncpa [#allocation4], 1
    %s514 = scalar_lea.sflag [#allocation4], 1
    %515 = vsyncpa %s514, 1
    %516 = vsyncpa [#allocation7], 1
    %517 = vsyncpa [#allocation5], 1
    %s518 = scalar_lea.sflag [#allocation5], 1
    %519 = vsyncpa %s518, 1

</llo_original>
